<compile_context>
chip_gen: v5e
topology: v5e:2x2
jax: 0.10.0
libtpu: 0.0.40
codegen_flags: <defaults>
</compile_context>

<pallas_src>
import jax
import jax.numpy as jnp
from jax.experimental import pallas as pl
from jax.experimental.pallas import tpu as pltpu

_LANE = 128
_TARGET_BLOCK_BYTES = 4 * 1024 * 1024   # ~4 MiB/block; 4 live buffers = 16 MiB
_VMEM_LIMIT_BYTES = 40 * 1024 * 1024    # explicit scoped-VMEM limit (fits v7x/v6e/v5e)


def _ceil_div(a, b):
    return -(-a // b)


def _make_piecewise_kernel(a1, b1, a2, b2, c):
    # Constants are trace-time Python floats -> VPU immediates, no SMEM params.
    def kernel(x_ref, o_ref):
        x = x_ref[...]
        mask = x < c
        coef = jnp.where(mask, a1, a2)
        bias = jnp.where(mask, b1, b2)
        o_ref[...] = (coef * x + bias).astype(o_ref.dtype)
    return kernel


def _piecewise_ref(x, a1, b1, a2, b2, c):
    # Plain-JAX fallback for tiny tails (<128 elements).
    return jnp.where(x < c, a1 * x + b1, a2 * x + b2).astype(x.dtype)


def _run_pallas_2d(x2d, a1, b1, a2, b2, c):
    rows, width = x2d.shape
    dtype = x2d.dtype
    itemsize = jnp.dtype(dtype).itemsize
    # dtype-aware sublane multiple: 8 for f32, 16 for bf16, 32 for int8/fp8.
    sub = max(8, 32 // itemsize)

    if rows <= sub:
        tile_r = rows                      # block == full dim (always legal)
        n_blocks = 1
    else:
        max_rows = max(sub, (_TARGET_BLOCK_BYTES // (width * itemsize)) // sub * sub)
        n_blocks = _ceil_div(rows, max_rows)
        # Give the v7x megacore at least 2 blocks when there is enough work,
        # and keep the block count even so the 2 TensorCores stay balanced.
        if n_blocks == 1 and rows >= 2 * sub:
            n_blocks = 2
        if n_blocks > 1 and n_blocks % 2 == 1:
            n_blocks += 1
        tile_r = _ceil_div(_ceil_div(rows, n_blocks), sub) * sub
        tile_r = min(tile_r, rows)
        n_blocks = _ceil_div(rows, tile_r)

    total = rows * width
    cost = pl.CostEstimate(flops=5 * total,
                           transcendentals=0,
                           bytes_accessed=2 * total * itemsize)

    return pl.pallas_call(
        _make_piecewise_kernel(a1, b1, a2, b2, c),
        out_shape=jax.ShapeDtypeStruct((rows, width), dtype),
        grid=(n_blocks,),
        in_specs=[pl.BlockSpec((tile_r, width), lambda i: (i, 0))],
        out_specs=pl.BlockSpec((tile_r, width), lambda i: (i, 0)),
        compiler_params=pltpu.CompilerParams(
            dimension_semantics=("parallel",),
            vmem_limit_bytes=_VMEM_LIMIT_BYTES),
        cost_estimate=cost,
    )(x2d)


def piecewise_linear_activation(x, a1=1.0, b1=0.0, a2=1.0, b2=0.0, c=0.0):
    """Applies y = where(x < c, a1*x + b1, a2*x + b2) elementwise (any shape)."""
    orig_shape = x.shape
    total = x.size
    if total == 0:
        return x

    x_flat = jnp.ravel(x)

    # 128-aligned head goes through Pallas; <128-element tail is handled in
    # the wrapper (single pass over HBM, no pad+slice round trip).
    head = (total // _LANE) * _LANE
    if head == 0:
        return _piecewise_ref(x_flat, a1, b1, a2, b2, c).reshape(orig_shape)

    # Widest lane-dense width (multiple of 128, capped at 2048) dividing head.
    width = _LANE
    for w in (2048, 1024, 512, 256, 128):
        if head % w == 0:
            width = w
            break
    rows = head // width

    out_head = _run_pallas_2d(
        x_flat[:head].reshape(rows, width), a1, b1, a2, b2, c
    ).reshape(head)

    if head == total:
        out_flat = out_head
    else:
        out_tail = _piecewise_ref(x_flat[head:], a1, b1, a2, b2, c)
        out_flat = jnp.concatenate([out_head, out_tail])

    return out_flat.reshape(orig_shape)


if __name__ == "__main__":
    key = jax.random.PRNGKey(0)
    # NCHW input, small shape consistent with a conv-style activation usage.
    x = jax.random.normal(key, (2, 4, 16, 16), dtype=jnp.float32)

    # Distinct parameter values so both branches of the piecewise fn are hit.
    a1, b1, a2, b2, c = 0.5, -0.25, 2.0, 0.1, 0.0

    y = piecewise_linear_activation(x, a1, b1, a2, b2, c)
    y = jax.block_until_ready(y)

    # Reference check in plain JAX (mirrors torch.where(x < c, a1*x+b1, a2*x+b2)).
    y_ref = jnp.where(x < c, a1 * x + b1, a2 * x + b2)
    assert y.shape == x.shape and y.dtype == x.dtype
    assert jnp.allclose(y, y_ref, atol=1e-6, rtol=1e-6)

    print("KERNEL_OK")
</pallas_src>

<mosaic_0001>
module attributes {stable_mosaic.version = 11 : i64} {
  func.func @kernel(%arg0: i32, %arg1: memref<1x2048xf32, #tpu.memory_space<vmem>>, %arg2: memref<1x2048xf32, #tpu.memory_space<vmem>>) attributes {dimension_semantics = [#tpu.dimension_semantics<parallel>], iteration_bounds = array<i64: 1>, scalar_prefetch = 0 : i64, scratch_operands = 0 : i64, tpu.core_type = #tpu.core_type<tc>, window_params = [{transform_indices = @transform_0, window_bounds = array<i64: 1, 2048>}, {transform_indices = @transform_1, window_bounds = array<i64: 1, 2048>}]} {
    %c0 = arith.constant 0 : index
    %c0_0 = arith.constant 0 : index
    %0 = vector.load %arg1[%c0, %c0_0] : memref<1x2048xf32, #tpu.memory_space<vmem>>, vector<1x2048xf32>
    %cst = arith.constant 0.000000e+00 : f32
    %1 = vector.broadcast %cst : f32 to vector<1x2048xf32>
    %2 = arith.cmpf olt, %0, %1 : vector<1x2048xf32>
    %cst_1 = arith.constant 5.000000e-01 : f32
    %cst_2 = arith.constant 2.000000e+00 : f32
    %3 = vector.broadcast %cst_1 : f32 to vector<1x2048xf32>
    %4 = vector.broadcast %cst_2 : f32 to vector<1x2048xf32>
    %5 = arith.select %2, %3, %4 : vector<1x2048xi1>, vector<1x2048xf32>
    %cst_3 = arith.constant -2.500000e-01 : f32
    %cst_4 = arith.constant 1.000000e-01 : f32
    %6 = vector.broadcast %cst_3 : f32 to vector<1x2048xf32>
    %7 = vector.broadcast %cst_4 : f32 to vector<1x2048xf32>
    %8 = arith.select %2, %6, %7 : vector<1x2048xi1>, vector<1x2048xf32>
    %9 = arith.mulf %5, %0 : vector<1x2048xf32>
    %10 = arith.addf %9, %8 : vector<1x2048xf32>
    %c0_5 = arith.constant 0 : index
    %c0_6 = arith.constant 0 : index
    %11 = vector.load %arg2[%c0_5, %c0_6] : memref<1x2048xf32, #tpu.memory_space<vmem>>, vector<1x2048xf32>
    tpu.vector_store %arg2[%c0_5, %c0_6], %10 {strides = array<i32>} : memref<1x2048xf32, #tpu.memory_space<vmem>>, vector<1x2048xf32>,
    return
  }
  func.func @transform_0(%arg0: i32) -> (i32, i32) {
    %c0_i32 = arith.constant 0 : i32
    %c0_i32_0 = arith.constant 0 : i32
    return %arg0, %c0_i32 : i32, i32
  }
  func.func @transform_1(%arg0: i32) -> (i32, i32) {
    %c0_i32 = arith.constant 0 : i32
    %c0_i32_0 = arith.constant 0 : i32
    return %arg0, %c0_i32 : i32, i32
  }
}

</mosaic_0001>

<llo_original>
// kernel: tpu_custom_call.1
$region0: #{tpu_custom_call.1}
  #allocation0 [shape = 'u32[]', space=smem, size = 0x4, offset = 0x4, fixed_abs, tag = 'smem constant byte address 0x4 - core index']
  #allocation1 [shape = 'u32[72,128]{1,0:T(1,128)}', space=vmem, size = 0x9000, scoped, tag = 'internal scratch']
  %s0 = inlined_call_operand.hbm [shape: f32[1,2048], index: 0, kind: input, shape index: {}]
  %s1 = inlined_call_operand.hbm [shape: f32[1,2048], index: 1, kind: output, shape index: {}]
  %s2 = sld [smem:[#allocation0]]
  $region18: #{tpu_custom_call.1} parent=0
    _
  %s4 = ssub.s32 1, %s2
  %s5 = scalar_select 0, %s4, %s2
  $region1: #{tpu_custom_call.1} parent=0
    #allocation2 [shape = 'u8[8192]{0}', space=vmem, size = 0x2000, scoped, tag = 'input window, operand 0, single buffered']
    #allocation3 [shape = 's32[1]{0}', space=sflag, size = 0x4, scoped, tag = 'scoped memory for tpu_custom_call.1']
    #allocation4 [shape = 's32[1]{0}', space=sflag, size = 0x4, scoped, tag = 'scoped memory for tpu_custom_call.1']
    #allocation5 [shape = 'u8[8192]{0}', space=vmem, size = 0x2000, scoped, tag = 'output window, operand 0, single buffered']
    %6 = vsyncpa [#allocation3], 0
    %7 = vsyncpa [#allocation4], 0
    // Predicated region
    $region2: #{tpu_custom_call.1} parent=1 // pred_check
      _
    $region3: #{tpu_custom_call.1} parent=1 // pred_check_branch
      %9 = sbr.rel (0) target = $region5
    $region4: #{tpu_custom_call.1} parent=1 // pred_region
      %11 = vsyncadd [#allocation3], 0
      %s13 = sshll.u32 %s0, 4
      %s14 = int_to_ptr.hbm [resolvable:$true] %s13
      %s15 = sshll.u32 [#allocation2], 4
      %s16 = int_to_ptr.vmem [resolvable:$true] %s15
      %18 = dma.hbm_to_vmem [thread:$0]  %s14, 256, %s16, [#allocation3]
    $region5: #{tpu_custom_call.1} parent=1 // pred_fallthru
      _
    // Predicated region
    $region6: #{tpu_custom_call.1} parent=1 // pred_check
      _
    $region7: #{tpu_custom_call.1} parent=1 // pred_check_branch
      %20 = sbr.rel (0) target = $region9
    $region8: #{tpu_custom_call.1} parent=1 // pred_region
      %22 = dma.done [#allocation3], 256
    $region9: #{tpu_custom_call.1} parent=1 // pred_fallthru
      _
    %v23 = vld [vmem:[#allocation2] sm:$0xff]
    %v24 = vld [vmem:[#allocation2 + $0x8] sm:$0xff]
    %vm25 = vcmp.lt.f32.partialorder %v23, 0.0
    %vm26 = vcmp.lt.f32.partialorder %v24, 0.0
    %v27 = vsel %vm25, 0.5, 2.0
    %v28 = vsel %vm26, 0.5, 2.0
    %v29 = vsel %vm25, -0.25, 0.1
    %v30 = vsel %vm26, -0.25, 0.1
    %v31 = vmul.f32 %v27, %v23
    %v32 = vmul.f32 %v28, %v24
    %v33 = vadd.f32 %v31, %v29
    %v34 = vadd.f32 %v32, %v30
    %35 = vst [vmem:[#allocation5] sm:$0xff] %v33
    %36 = vst [vmem:[#allocation5 + $0x8] sm:$0xff] %v34
    // Predicated region
    $region10: #{tpu_custom_call.1} parent=1 // pred_check
      _
    $region11: #{tpu_custom_call.1} parent=1 // pred_check_branch
      %38 = sbr.rel (0) target = $region13
    $region12: #{tpu_custom_call.1} parent=1 // pred_region
      %40 = vsyncadd [#allocation4], 0
      %s42 = sshll.u32 [#allocation5], 4
      %s43 = int_to_ptr.vmem [resolvable:$true] %s42
      %s44 = sshll.u32 %s1, 4
      %s45 = int_to_ptr.hbm [resolvable:$true] %s44
      %47 = dma.vmem_to_hbm [thread:$0]  %s43, 256, %s45, [#allocation4]
    $region13: #{tpu_custom_call.1} parent=1 // pred_fallthru
      _
    // Predicated region
    $region14: #{tpu_custom_call.1} parent=1 // pred_check
      _
    $region15: #{tpu_custom_call.1} parent=1 // pred_check_branch
      %49 = sbr.rel (0) target = $region17
    $region16: #{tpu_custom_call.1} parent=1 // pred_region
      %51 = dma.done [#allocation4], 256
    $region17: #{tpu_custom_call.1} parent=1 // pred_fallthru
      _
    %52 = vsyncpa [#allocation3], 1
    %53 = vsyncpa [#allocation4], 1

</llo_original>
